<compile_context>
chip_gen: v7x
topology: tpu7x:2x2x1
jax: 0.10.0
libtpu: 0.0.40
codegen_flags: <defaults>
</compile_context>

<pallas_src>
import jax
import jax.numpy as jnp
import numpy as np
from jax.experimental import pallas as pl
from jax.experimental.pallas import tpu as pltpu

KH = KW = 25          # gaussian window size (gaussian_kernel(25, 11.2))
SIGMA = 11.2
PAD = KH // 2         # padding='same' for a 25-tap kernel
C_IN = 3
C_OUT = 3


# --------------------- compile-time gaussian taps / frozen params ---------------------

def _gaussian_1d_np(window_size: int, sigma: float) -> np.ndarray:
    x = np.arange(window_size, dtype=np.float32) - window_size // 2
    if window_size % 2 == 0:
        x = x + 0.5
    g = np.exp(-(x.astype(np.float64) ** 2) / (2.0 * sigma ** 2))
    return (g / g.sum()).astype(np.float32)


def _band_matrix_np(n: int) -> np.ndarray:
    """Banded 'same'-padding Gaussian conv matrix M with M[i, j] = g[j - i + PAD].

    Vertical pass:   out = M(H) @ x        (out[i] = sum_k g[k] * x[i + k - PAD])
    Horizontal pass: out = x @ M(W).T      (out[:, i] = sum_k g[k] * x[:, i + k - PAD])
    Zero padding is encoded by simply clipping the band at the matrix edges.
    """
    g = _gaussian_1d_np(KH, SIGMA)
    m = np.zeros((n, n), dtype=np.float32)
    for i in range(n):
        lo = max(0, i - PAD)
        hi = min(n, i + PAD + 1)
        for j in range(lo, hi):
            m[i, j] = g[j - i + PAD]
    return m


def gaussian_kernel_2d() -> jnp.ndarray:
    """(3, 3, 25, 25) gaussian weight, used only by the pure-JAX reference."""
    g = jnp.asarray(_gaussian_1d_np(KH, SIGMA))
    k2 = jnp.outer(g, g)
    return jnp.broadcast_to(k2, (C_OUT, C_IN, KH, KW))


def synthetic_center_bias(h: int, w: int) -> jnp.ndarray:
    # TODO(synk): deterministic stand-in for center_bias_density.npy (file not available).
    gy = _gaussian_1d_np(h, h / 4.0)
    gx = _gaussian_1d_np(w, w / 4.0)
    density = np.outer(gy, gx)
    density = density / density.sum()
    return jnp.asarray(density, dtype=jnp.float32)


# ----------------------------------- Pallas kernel ------------------------------------

def fused_fixation_kernel(hs_ref, x_ref, av_ref, bh_ref, cb_ref, o_ref):
    """Fused forward for one block of batch elements.

    hs_ref : SMEM (1,) f32          sum of surrogate head weights (head is linear -> folds)
    x_ref  : VMEM (B_blk, C, H, W)  input images (any float dtype; upcast to f32)
    av_ref : VMEM (H, H) f32        vertical banded Gaussian matrix  (out = A @ x)
    bh_ref : VMEM (W, W) f32        horizontal banded Gaussian matrix (out = x @ B)
    cb_ref : VMEM (H, W) f32        log(center_bias)
    o_ref  : VMEM (B_blk, 1, H, W)  output
    """
    b_blk, c_in, _, _ = x_ref.shape

    a_v = av_ref[...]          # hoisted once per grid step
    b_h = bh_ref[...]
    cb = cb_ref[...]
    hs = hs_ref[0]

    for b in range(b_blk):
        # Channel collapse: every (co, ci) filter is the identical Gaussian, so the
        # conv of each output channel equals the conv of the channel sum.
        xsum = x_ref[b, 0].astype(jnp.float32)
        for ci in range(1, c_in):
            xsum = xsum + x_ref[b, ci].astype(jnp.float32)

        # Separable 25-tap Gaussian conv as two MXU matmuls; 'same' zero padding is
        # baked into the band matrices (no padded scratch, no misaligned slices).
        tv = jnp.dot(a_v, xsum, preferred_element_type=jnp.float32)     # (H, W)
        conv = jnp.dot(tv, b_h, preferred_element_type=jnp.float32)     # (H, W)

        # Folded linear head + log(center_bias).
        o_ref[b, 0] = (hs * conv + cb).astype(o_ref.dtype)


# ------------------------------------- wrapper ----------------------------------------

def _vmem_capacity_bytes() -> int:
    try:
        info = pltpu.get_tpu_info()
        cap = getattr(info, "vmem_capacity_bytes", None)
        if cap:
            return int(cap)
    except Exception:
        pass
    return 64 * 1024 * 1024   # v7x floor — safe on every generation


def _choose_batch_block(n: int, c: int, h: int, w: int, budget_bytes: int) -> int:
    """Largest divisor of n that (a) keeps >= 2 grid steps when n >= 2 (megacore on
    v7x) and (b) keeps the double-buffered in/out block under the VMEM budget."""
    if n <= 1:
        return 1
    best = 1
    for d in range(1, n // 2 + 1):
        if n % d != 0:
            continue
        per_block = (c + 1) * d * h * w * 4 * 2   # in + out blocks, double-buffered f32
        if per_block <= budget_bytes:
            best = d
    return best


def eye_fixation_cnn_forward(x, head_w, log_cb):
    """x: (N, 3, H, W) float; head_w: (3,) surrogate linear head; log_cb: (H, W)."""
    n, c, h, w = x.shape

    # TODO(synk): torchvision fcn_resnet50 (frozen pretrained ResNet-50 backbone + FCN head)
    # is not translated; a linear 1x1-conv surrogate head preserves the (N, 1, H, W)
    # contract, and being linear it folds exactly to sum(head_w) applied after the conv.
    head_sum = jnp.sum(head_w).reshape(1).astype(jnp.float32)

    # Compile-time banded Gaussian matrices (frozen params, like the PyTorch buffer).
    a_band = jnp.asarray(_band_matrix_np(h), dtype=jnp.float32)        # vertical
    b_band = jnp.asarray(_band_matrix_np(w).T, dtype=jnp.float32)      # horizontal

    vmem_cap = _vmem_capacity_bytes()
    b_blk = _choose_batch_block(n, c, h, w, vmem_cap // 4)
    grid = (n // b_blk,)

    # Explicit, generation-aware scoped-VMEM limit with headroom.
    needed = 2 * 4 * (b_blk * (c + 1) * h * w + h * h + w * w + h * w)
    vmem_limit = int(min(max(2 * needed + (8 << 20), 32 << 20), 0.75 * vmem_cap))

    return pl.pallas_call(
        fused_fixation_kernel,
        out_shape=jax.ShapeDtypeStruct((n, 1, h, w), jnp.float32),
        grid=grid,
        in_specs=[
            pl.BlockSpec(memory_space=pltpu.MemorySpace.SMEM),          # folded head weight
            pl.BlockSpec((b_blk, c, h, w), lambda i: (i, 0, 0, 0)),     # input images
            pl.BlockSpec((h, h), lambda i: (0, 0)),                     # vertical band
            pl.BlockSpec((w, w), lambda i: (0, 0)),                     # horizontal band
            pl.BlockSpec((h, w), lambda i: (0, 0)),                     # log center bias
        ],
        out_specs=pl.BlockSpec((b_blk, 1, h, w), lambda i: (i, 0, 0, 0)),
        compiler_params=pltpu.CompilerParams(
            dimension_semantics=("parallel",),
            vmem_limit_bytes=vmem_limit),
    )(head_sum, x, a_band, b_band, log_cb)


# --------------------------------- pure-JAX reference ----------------------------------

def reference_forward(x, gauss_w, head_w, log_cb):
    y = jax.lax.conv_general_dilated(
        x.astype(jnp.float32), gauss_w, window_strides=(1, 1), padding="SAME",
        dimension_numbers=("NCHW", "OIHW", "NCHW"),
        precision=jax.lax.Precision.HIGHEST)
    out = jnp.einsum("nchw,c->nhw", y, head_w,
                     precision=jax.lax.Precision.HIGHEST)[:, None, :, :]
    return out + log_cb[None, None, :, :]


if __name__ == "__main__":
    key = jax.random.PRNGKey(0)
    # W = 128 keeps output stores lane-dense (full 128-lane vregs).
    N, H, W = 2, 32, 128
    x = jax.random.normal(key, (N, C_IN, H, W), dtype=jnp.float32)

    log_cb = jnp.log(synthetic_center_bias(H, W))                  # log(center_bias), frozen
    head_w = jnp.array([0.25, -0.5, 0.75], dtype=jnp.float32)      # deterministic surrogate head

    out = eye_fixation_cnn_forward(x, head_w, log_cb)
    out = jax.block_until_ready(out)

    gauss_w = gaussian_kernel_2d()                                 # (3, 3, 25, 25), frozen
    ref = reference_forward(x, gauss_w, head_w, log_cb)
    assert out.shape == (N, 1, H, W)
    np.testing.assert_allclose(np.asarray(out), np.asarray(ref), rtol=2e-3, atol=2e-3)
    print("KERNEL_OK")
</pallas_src>

<mosaic_0001>
module attributes {stable_mosaic.version = 11 : i64} {
  func.func @fused_fixation_kernel(%arg0: i32, %arg1: memref<1xf32, #tpu.memory_space<smem>>, %arg2: memref<1x3x32x128xf32, #tpu.memory_space<vmem>>, %arg3: memref<32x32xf32, #tpu.memory_space<vmem>>, %arg4: memref<128x128xf32, #tpu.memory_space<vmem>>, %arg5: memref<32x128xf32, #tpu.memory_space<vmem>>, %arg6: memref<1x1x32x128xf32, #tpu.memory_space<vmem>>) attributes {dimension_semantics = [#tpu.dimension_semantics<parallel>], iteration_bounds = array<i64: 2>, scalar_prefetch = 0 : i64, scratch_operands = 0 : i64, tpu.core_type = #tpu.core_type<tc>, window_params = [{transform_indices = @transform_0, window_bounds = array<i64: 1>}, {transform_indices = @transform_1, window_bounds = array<i64: 1, 3, 32, 128>}, {pipeline_mode = #tpu.pipeline_mode<synchronous>, transform_indices = @transform_2, window_bounds = array<i64: 32, 32>}, {pipeline_mode = #tpu.pipeline_mode<synchronous>, transform_indices = @transform_3, window_bounds = array<i64: 128, 128>}, {pipeline_mode = #tpu.pipeline_mode<synchronous>, transform_indices = @transform_4, window_bounds = array<i64: 32, 128>}, {transform_indices = @transform_5, window_bounds = array<i64: 1, 1, 32, 128>}]} {
    %c0 = arith.constant 0 : index
    %c0_0 = arith.constant 0 : index
    %0 = vector.load %arg3[%c0, %c0_0] : memref<32x32xf32, #tpu.memory_space<vmem>>, vector<32x32xf32>
    %c0_1 = arith.constant 0 : index
    %c0_2 = arith.constant 0 : index
    %1 = vector.load %arg4[%c0_1, %c0_2] : memref<128x128xf32, #tpu.memory_space<vmem>>, vector<128x128xf32>
    %c0_3 = arith.constant 0 : index
    %c0_4 = arith.constant 0 : index
    %2 = vector.load %arg5[%c0_3, %c0_4] : memref<32x128xf32, #tpu.memory_space<vmem>>, vector<32x128xf32>
    %c0_5 = arith.constant 0 : index
    %3 = memref.load %arg1[%c0_5] : memref<1xf32, #tpu.memory_space<smem>>
    %c0_6 = arith.constant 0 : index
    %c0_7 = arith.constant 0 : index
    %c0_8 = arith.constant 0 : index
    %c0_9 = arith.constant 0 : index
    %4 = vector.load %arg2[%c0_6, %c0_7, %c0_8, %c0_9] : memref<1x3x32x128xf32, #tpu.memory_space<vmem>>, vector<1x1x32x128xf32>
    %5 = vector.shape_cast %4 : vector<1x1x32x128xf32> to vector<32x128xf32>
    %c0_10 = arith.constant 0 : index
    %c1 = arith.constant 1 : index
    %c0_11 = arith.constant 0 : index
    %c0_12 = arith.constant 0 : index
    %6 = vector.load %arg2[%c0_10, %c1, %c0_11, %c0_12] : memref<1x3x32x128xf32, #tpu.memory_space<vmem>>, vector<1x1x32x128xf32>
    %7 = vector.shape_cast %6 : vector<1x1x32x128xf32> to vector<32x128xf32>
    %8 = arith.addf %5, %7 : vector<32x128xf32>
    %c0_13 = arith.constant 0 : index
    %c2 = arith.constant 2 : index
    %c0_14 = arith.constant 0 : index
    %c0_15 = arith.constant 0 : index
    %9 = vector.load %arg2[%c0_13, %c2, %c0_14, %c0_15] : memref<1x3x32x128xf32, #tpu.memory_space<vmem>>, vector<1x1x32x128xf32>
    %10 = vector.shape_cast %9 : vector<1x1x32x128xf32> to vector<32x128xf32>
    %11 = arith.addf %8, %10 : vector<32x128xf32>
    %cst = arith.constant dense<0.000000e+00> : vector<32x128xf32>
    %12 = tpu.matmul %0, %11, %cst {dimension_numbers = #tpu.dot_dimension_numbers<[1], [0], [0], [1], [0, 0, 1, 1], [], []>} : vector<32x32xf32>, vector<32x128xf32>, vector<32x128xf32> -> vector<32x128xf32>
    %cst_16 = arith.constant dense<0.000000e+00> : vector<32x128xf32>
    %13 = tpu.matmul %12, %1, %cst_16 {dimension_numbers = #tpu.dot_dimension_numbers<[1], [0], [0], [1], [0, 0, 1, 1], [], []>} : vector<32x128xf32>, vector<128x128xf32>, vector<32x128xf32> -> vector<32x128xf32>
    %14 = vector.broadcast %3 : f32 to vector<32x128xf32>
    %15 = arith.mulf %14, %13 : vector<32x128xf32>
    %16 = arith.addf %15, %2 : vector<32x128xf32>
    %c0_17 = arith.constant 0 : index
    %c0_18 = arith.constant 0 : index
    %c0_19 = arith.constant 0 : index
    %c0_20 = arith.constant 0 : index
    %17 = vector.load %arg6[%c0_17, %c0_18, %c0_19, %c0_20] : memref<1x1x32x128xf32, #tpu.memory_space<vmem>>, vector<1x1x32x128xf32>
    %18 = vector.shape_cast %17 : vector<1x1x32x128xf32> to vector<32x128xf32>
    %19 = vector.shape_cast %16 : vector<32x128xf32> to vector<1x1x32x128xf32>
    tpu.vector_store %arg6[%c0_17, %c0_18, %c0_19, %c0_20], %19 {strides = array<i32>} : memref<1x1x32x128xf32, #tpu.memory_space<vmem>>, vector<1x1x32x128xf32>,
    return
  }
  func.func @transform_0(%arg0: i32) -> i32 {
    %c0_i32 = arith.constant 0 : i32
    %c0_i32_0 = arith.constant 0 : i32
    return %c0_i32 : i32
  }
  func.func @transform_1(%arg0: i32) -> (i32, i32, i32, i32) {
    %c0_i32 = arith.constant 0 : i32
    %c0_i32_0 = arith.constant 0 : i32
    %c0_i32_1 = arith.constant 0 : i32
    %c0_i32_2 = arith.constant 0 : i32
    return %arg0, %c0_i32, %c0_i32_0, %c0_i32_1 : i32, i32, i32, i32
  }
  func.func @transform_2(%arg0: i32) -> (i32, i32) {
    %c0_i32 = arith.constant 0 : i32
    %c0_i32_0 = arith.constant 0 : i32
    %c0_i32_1 = arith.constant 0 : i32
    return %c0_i32, %c0_i32_0 : i32, i32
  }
  func.func @transform_3(%arg0: i32) -> (i32, i32) {
    %c0_i32 = arith.constant 0 : i32
    %c0_i32_0 = arith.constant 0 : i32
    %c0_i32_1 = arith.constant 0 : i32
    return %c0_i32, %c0_i32_0 : i32, i32
  }
  func.func @transform_4(%arg0: i32) -> (i32, i32) {
    %c0_i32 = arith.constant 0 : i32
    %c0_i32_0 = arith.constant 0 : i32
    %c0_i32_1 = arith.constant 0 : i32
    return %c0_i32, %c0_i32_0 : i32, i32
  }
  func.func @transform_5(%arg0: i32) -> (i32, i32, i32, i32) {
    %c0_i32 = arith.constant 0 : i32
    %c0_i32_0 = arith.constant 0 : i32
    %c0_i32_1 = arith.constant 0 : i32
    %c0_i32_2 = arith.constant 0 : i32
    return %arg0, %c0_i32, %c0_i32_0, %c0_i32_1 : i32, i32, i32, i32
  }
}

</mosaic_0001>

<llo_original>
// kernel: tpu_custom_call.1
$region0: #{tpu_custom_call.1}
  #allocation0 [shape = 'u32[]', space=smem, size = 0x4, offset = 0x4, fixed_abs, tag = 'smem constant byte address 0x4 - core index']
  #allocation1 [shape = 'u32[144,128]{1,0:T(1,128)}', space=vmem, size = 0x12000, scoped, tag = 'internal scratch']
  #allocation2 [shape = 'f32[1]{0:T(128)S(6)}', space=smem, size = 0x200, scoped, tag = 'scoped memory for tpu_custom_call.1']
  %s0 = inlined_call_operand.<no memory space> [shape: f32[1], index: 0, kind: input, shape index: {}]
  %s1 = inlined_call_operand.hbm [shape: f32[2,3,32,128], index: 1, kind: input, shape index: {}]
  %s2 = inlined_call_operand.hbm [shape: f32[32,32], index: 2, kind: input, shape index: {}]
  %s3 = inlined_call_operand.hbm [shape: f32[128,128], index: 3, kind: input, shape index: {}]
  %s4 = inlined_call_operand.hbm [shape: f32[32,128], index: 4, kind: input, shape index: {}]
  %s5 = inlined_call_operand.hbm [shape: f32[2,1,32,128], index: 5, kind: output, shape index: {}]
  %s6 = sld [smem:[#allocation0]]
  $region69: #{tpu_custom_call.1} parent=0
    _
  %s8 = ssub.s32 1, %s6
  %s9 = scalar_select 0, %s8, %s6
  %10 = sst [smem:[#allocation2]] %s0
  $region1: #{tpu_custom_call.1} parent=0
    #allocation3 [shape = 'u8[98304]{0}', space=vmem, size = 0x18000, scoped, tag = 'input window, operand 1']
    #allocation4 [shape = 's32[2]{0}', space=sflag, size = 0x8, scoped, tag = 'scoped memory for tpu_custom_call.1']
    #allocation5 [shape = 's32[2]{0}', space=sflag, size = 0x8, scoped, tag = 'scoped memory for tpu_custom_call.1']
    #allocation6 [shape = 'u8[16384]{0}', space=vmem, size = 0x4000, scoped, tag = 'input window, operand 2, single buffered']
    #allocation7 [shape = 's32[1]{0}', space=sflag, size = 0x4, scoped, tag = 'scoped memory for tpu_custom_call.1']
    #allocation8 [shape = 'u8[65536]{0}', space=vmem, size = 0x10000, scoped, tag = 'input window, operand 3, single buffered']
    #allocation9 [shape = 'u8[16384]{0}', space=vmem, size = 0x4000, scoped, tag = 'input window, operand 4, single buffered']
    #allocation10 [shape = 's32[1]{0}', space=sflag, size = 0x4, scoped, tag = 'scoped memory for tpu_custom_call.1']
    #allocation11 [shape = 'u8[32768]{0}', space=vmem, size = 0x8000, scoped, tag = 'output window, operand 0']
    %11 = vsyncpa [#allocation4], 0
    %s12 = scalar_lea.sflag [#allocation4], 1
    %13 = vsyncpa %s12, 0
    %14 = vsyncpa [#allocation7], 0
    %15 = vsyncpa [#allocation10], 0
    %16 = vsyncpa [#allocation5], 0
    %s17 = scalar_lea.sflag [#allocation5], 1
    %18 = vsyncpa %s17, 0
    loop: start=0, step=1, limit=4
    $region2: #{tpu_custom_call.1} parent=1 // loop_pre_header
      _
    $region3: #{tpu_custom_call.1} parent=1 // loop_header
      %s20 = sphi 0, %s24
      %p21 = scmp.ge.s32.totalorder %s20, 4
      %s28 = sphi 0, %s28
      %s30 = sphi 0, %s28
      %s31 = sphi 0, %s30
      %s45 = sphi 0, %s31
      %s51 = sphi 0, %s53
      %s54 = sphi 0, %s51
      %s55 = sphi 0, %s54
      %s71 = sphi 0, %s55
      %s75 = sphi 0, %s75
      %s77 = sphi 0, %s75
      %s78 = sphi 0, %s77
      %s92 = sphi 0, %s78
      %s96 = sphi 0, %s96
      %s98 = sphi 0, %s96
      %s99 = sphi 0, %s98
      %s113 = sphi 0, %s99
      %s117 = sphi 0, %s117
      %s119 = sphi 0, %s117
      %s120 = sphi 0, %s119
      %s134 = sphi 0, %s120
      %s140 = sphi 0, %s142
      %s143 = sphi 0, %s140
      %s144 = sphi 0, %s143
      %s160 = sphi 0, %s144
    $region4: #{tpu_custom_call.1} parent=1 // loop_header_branch
      %23 = sbr.rel (%p21) target = $region8
    $region5: #{tpu_custom_call.1} parent=1 // loop_body
      %s25 = ssub.s32 %s20, 1
      %s26 = ssub.s32 %s20, 2
      %s27 = sadd.s32 %s20, 1
      %s29 = sadd.s32 %s28, 1
      %p32 = scmp.eq.s32.totalorder %s20, 1
      %p33 = scmp.ne.s32.totalorder %s28, %s30
      %p34 = scmp.eq.s32.totalorder %s20, 0
      %p35 = por %p33, %p34
      %p36 = scmp.ne.s32.totalorder %s28, %s30
      %p37 = scmp.eq.s32.totalorder %s25, 1
      %p38 = por %p36, %p37
      %p39 = scmp.ne.s32.totalorder %s30, %s31
      %p40 = scmp.eq.s32.totalorder %s25, 0
      %p41 = por %p39, %p40
      %p42 = scmp.ne.s32.totalorder %s30, %s31
      %p43 = scmp.eq.s32.totalorder %s26, 1
      %p44 = por %p42, %p43
      %p46 = scmp.ne.s32.totalorder %s31, %s45
      %p47 = scmp.eq.s32.totalorder %s26, 0
      %p48 = por %p46, %p47
      %s49 = ssub.s32 %s20, %s27
      %p50 = scmp.eq.s32.totalorder %s49, 0
      %s52 = sadd.s32 %s51, 1
      %s53 = scalar_select %p50, %s51, %s52
      %p56 = pneg %p50
      %p57 = scmp.eq.s32.totalorder %s20, 1
      %p58 = por %p56, %p57
      %p59 = scmp.ne.s32.totalorder %s51, %s54
      %p60 = scmp.eq.s32.totalorder %s20, 0
      %p61 = por %p59, %p60
      %p62 = scmp.ne.s32.totalorder %s51, %s54
      %p63 = scmp.eq.s32.totalorder %s25, 1
      %p64 = por %p62, %p63
      %p65 = scmp.ne.s32.totalorder %s54, %s55
      %p66 = scmp.eq.s32.totalorder %s25, 0
      %p67 = por %p65, %p66
      %p68 = scmp.ne.s32.totalorder %s54, %s55
      %p69 = scmp.eq.s32.totalorder %s26, 1
      %p70 = por %p68, %p69
      %p72 = scmp.ne.s32.totalorder %s55, %s71
      %p73 = scmp.eq.s32.totalorder %s26, 0
      %p74 = por %p72, %p73
      %s76 = sadd.s32 %s75, 1
      %p79 = scmp.eq.s32.totalorder %s20, 1
      %p80 = scmp.ne.s32.totalorder %s75, %s77
      %p81 = scmp.eq.s32.totalorder %s20, 0
      %p82 = por %p80, %p81
      %p83 = scmp.ne.s32.totalorder %s75, %s77
      %p84 = scmp.eq.s32.totalorder %s25, 1
      %p85 = por %p83, %p84
      %p86 = scmp.ne.s32.totalorder %s77, %s78
      %p87 = scmp.eq.s32.totalorder %s25, 0
      %p88 = por %p86, %p87
      %p89 = scmp.ne.s32.totalorder %s77, %s78
      %p90 = scmp.eq.s32.totalorder %s26, 1
      %p91 = por %p89, %p90
      %p93 = scmp.ne.s32.totalorder %s78, %s92
      %p94 = scmp.eq.s32.totalorder %s26, 0
      %p95 = por %p93, %p94
      %s97 = sadd.s32 %s96, 1
      %p100 = scmp.eq.s32.totalorder %s20, 1
      %p101 = scmp.ne.s32.totalorder %s96, %s98
      %p102 = scmp.eq.s32.totalorder %s20, 0
      %p103 = por %p101, %p102
      %p104 = scmp.ne.s32.totalorder %s96, %s98
      %p105 = scmp.eq.s32.totalorder %s25, 1
      %p106 = por %p104, %p105
      %p107 = scmp.ne.s32.totalorder %s98, %s99
      %p108 = scmp.eq.s32.totalorder %s25, 0
      %p109 = por %p107, %p108
      %p110 = scmp.ne.s32.totalorder %s98, %s99
      %p111 = scmp.eq.s32.totalorder %s26, 1
      %p112 = por %p110, %p111
      %p114 = scmp.ne.s32.totalorder %s99, %s113
      %p115 = scmp.eq.s32.totalorder %s26, 0
      %p116 = por %p114, %p115
      %s118 = sadd.s32 %s117, 1
      %p121 = scmp.eq.s32.totalorder %s20, 1
      %p122 = scmp.ne.s32.totalorder %s117, %s119
      %p123 = scmp.eq.s32.totalorder %s20, 0
      %p124 = por %p122, %p123
      %p125 = scmp.ne.s32.totalorder %s117, %s119
      %p126 = scmp.eq.s32.totalorder %s25, 1
      %p127 = por %p125, %p126
      %p128 = scmp.ne.s32.totalorder %s119, %s120
      %p129 = scmp.eq.s32.totalorder %s25, 0
      %p130 = por %p128, %p129
      %p131 = scmp.ne.s32.totalorder %s119, %s120
      %p132 = scmp.eq.s32.totalorder %s26, 1
      %p133 = por %p131, %p132
      %p135 = scmp.ne.s32.totalorder %s120, %s134
      %p136 = scmp.eq.s32.totalorder %s26, 0
      %p137 = por %p135, %p136
      %s138 = ssub.s32 %s20, %s27
      %p139 = scmp.eq.s32.totalorder %s138, 0
      %s141 = sadd.s32 %s140, 1
      %s142 = scalar_select %p139, %s140, %s141
      %p145 = pneg %p139
      %p146 = scmp.eq.s32.totalorder %s20, 1
      %p147 = por %p145, %p146
      %p148 = scmp.ne.s32.totalorder %s140, %s143
      %p149 = scmp.eq.s32.totalorder %s20, 0
      %p150 = por %p148, %p149
      %p151 = scmp.ne.s32.totalorder %s140, %s143
      %p152 = scmp.eq.s32.totalorder %s25, 1
      %p153 = por %p151, %p152
      %p154 = scmp.ne.s32.totalorder %s143, %s144
      %p155 = scmp.eq.s32.totalorder %s25, 0
      %p156 = por %p154, %p155
      %p157 = scmp.ne.s32.totalorder %s143, %s144
      %p158 = scmp.eq.s32.totalorder %s26, 1
      %p159 = por %p157, %p158
      %p161 = scmp.ne.s32.totalorder %s144, %s160
      %p162 = scmp.eq.s32.totalorder %s26, 0
      %p163 = por %p161, %p162
      %p164 = scmp.le.s32.totalorder 1, %s20
      %p165 = scmp.lt.s32.totalorder %s20, 3
      %p166 = pnand %p164, %p165
      %p167 = pneg %p166
      // Predicated region
      $region9: #{tpu_custom_call.1} parent=5 // pred_check
        _
      $region10: #{tpu_custom_call.1} parent=5 // pred_check_branch
        %169 = sbr.rel (%p166) target = $region12
      $region11: #{tpu_custom_call.1} parent=5 // pred_region
        %s170 = ssub.s32 %s20, 1
        // Predicated region
        $region13: #{tpu_custom_call.1} parent=11 // pred_check
          %p171 = pneg %p41
        $region14: #{tpu_custom_call.1} parent=11 // pred_check_branch
          %173 = sbr.rel (%p171) target = $region16
        $region15: #{tpu_custom_call.1} parent=11 // pred_region
          _
        $region16: #{tpu_custom_call.1} parent=11 // pred_fallthru
          _
        // Predicated region
        $region17: #{tpu_custom_call.1} parent=11 // pred_check
          %p174 = pneg %p88
        $region18: #{tpu_custom_call.1} parent=11 // pred_check_branch
          %176 = sbr.rel (%p174) target = $region20
        $region19: #{tpu_custom_call.1} parent=11 // pred_region
          %s178 = ssub.s32 512, 512
          %179 = vsyncadd [#allocation7], %s178
          %s180 = sshll.u32 [#allocation6], 4
          %s181 = int_to_ptr.vmem [resolvable:$true] %s180
          %186 = dma.hbm_to_vmem [thread:$0]  %s2, 512, %s181, [#allocation7], 128, 128, 8
        $region20: #{tpu_custom_call.1} parent=11 // pred_fallthru
          _
        // Predicated region
        $region21: #{tpu_custom_call.1} parent=11 // pred_check
          %p187 = pneg %p109
        $region22: #{tpu_custom_call.1} parent=11 // pred_check_branch
          %189 = sbr.rel (%p187) target = $region24
        $region23: #{tpu_custom_call.1} parent=11 // pred_region
          %s191 = ssub.s32 2048, 2048
          %192 = vsyncadd [#allocation7], %s191
          %s193 = sshll.u32 [#allocation8], 4
          %s194 = int_to_ptr.vmem [resolvable:$true] %s193
          %199 = dma.hbm_to_vmem [thread:$0]  %s3, 2048, %s194, [#allocation7], 128, 128, 8
        $region24: #{tpu_custom_call.1} parent=11 // pred_fallthru
          _
        // Predicated region
        $region25: #{tpu_custom_call.1} parent=11 // pred_check
          %p200 = pneg %p130
        $region26: #{tpu_custom_call.1} parent=11 // pred_check_branch
          %202 = sbr.rel (%p200) target = $region28
        $region27: #{tpu_custom_call.1} parent=11 // pred_region
          %s204 = ssub.s32 512, 512
          %205 = vsyncadd [#allocation10], %s204
          %s206 = sshll.u32 [#allocation9], 4
          %s207 = int_to_ptr.vmem [resolvable:$true] %s206
          %212 = dma.hbm_to_vmem [thread:$0]  %s4, 512, %s207, [#allocation10], 128, 128, 8
        $region28: #{tpu_custom_call.1} parent=11 // pred_fallthru
          _
      $region12: #{tpu_custom_call.1} parent=5 // pred_fallthru
        _
      %p213 = scmp.lt.s32.totalorder %s20, 2
      // Predicated region
      $region29: #{tpu_custom_call.1} parent=5 // pred_check
        %p214 = pneg %p213
      $region30: #{tpu_custom_call.1} parent=5 // pred_check_branch
        %216 = sbr.rel (%p214) target = $region32
      $region31: #{tpu_custom_call.1} parent=5 // pred_region
        // Predicated region
        $region33: #{tpu_custom_call.1} parent=31 // pred_check
          %p217 = pneg %p61
        $region34: #{tpu_custom_call.1} parent=31 // pred_check_branch
          %219 = sbr.rel (%p217) target = $region36
        $region35: #{tpu_custom_call.1} parent=31 // pred_region
          %s220 = sand.u32 %s51, 1
          %s221 = scalar_lea.sflag [#allocation4], %s220
          %s222 = sand.u32 %s51, 1
          %s223 = smul.addr %s222, 96
          %s224 = scalar_lea.vmem [#allocation3], %s223
          %s226 = ssub.s32 1536, 1536
          %227 = vsyncadd %s221, %s226
          %s228 = smul.addr %s20, 12
          %s229 = smul.addr %s228, 128
          %s230 = scalar_lea.hbm %s1, %s229
          %s231 = sshll.u32 %s224, 4
          %s232 = int_to_ptr.vmem [resolvable:$true] %s231
          %237 = dma.hbm_to_vmem [thread:$0]  %s230, 1536, %s232, %s221, 128, 128, 8
        $region36: #{tpu_custom_call.1} parent=31 // pred_fallthru
          _
      $region32: #{tpu_custom_call.1} parent=5 // pred_fallthru
        _
      %p238 = scmp.le.s32.totalorder 1, %s20
      %p239 = scmp.lt.s32.totalorder %s20, 3
      %p240 = pnand %p238, %p239
      %p241 = pneg %p240
      // Predicated region
      $region37: #{tpu_custom_call.1} parent=5 // pred_check
        _
      $region38: #{tpu_custom_call.1} parent=5 // pred_check_branch
        %243 = sbr.rel (%p240) target = $region40
      $region39: #{tpu_custom_call.1} parent=5 // pred_region
        %s244 = ssub.s32 %s20, 1
        %s245 = sand.u32 %s54, 1
        %s246 = scalar_lea.sflag [#allocation4], %s245
        %s247 = sand.u32 %s54, 1
        %s248 = smul.addr %s247, 96
        %s249 = scalar_lea.vmem [#allocation3], %s248
        // Predicated region
        $region41: #{tpu_custom_call.1} parent=39 // pred_check
          %p250 = pneg %p67
        $region42: #{tpu_custom_call.1} parent=39 // pred_check_branch
          %252 = sbr.rel (%p250) target = $region44
        $region43: #{tpu_custom_call.1} parent=39 // pred_region
          %253 = dma.done %s246, 1536
        $region44: #{tpu_custom_call.1} parent=39 // pred_fallthru
          _
        // Predicated region
        $region45: #{tpu_custom_call.1} parent=39 // pred_check
          %p254 = pneg %p88
        $region46: #{tpu_custom_call.1} parent=39 // pred_check_branch
          %256 = sbr.rel (%p254) target = $region48
        $region47: #{tpu_custom_call.1} parent=39 // pred_region
          %257 = dma.done [#allocation7], 512
        $region48: #{tpu_custom_call.1} parent=39 // pred_fallthru
          _
        // Predicated region
        $region49: #{tpu_custom_call.1} parent=39 // pred_check
          %p258 = pneg %p109
        $region50: #{tpu_custom_call.1} parent=39 // pred_check_branch
          %260 = sbr.rel (%p258) target = $region52
        $region51: #{tpu_custom_call.1} parent=39 // pred_region
          %261 = dma.done [#allocation7], 2048
        $region52: #{tpu_custom_call.1} parent=39 // pred_fallthru
          _
        // Predicated region
        $region53: #{tpu_custom_call.1} parent=39 // pred_check
          %p262 = pneg %p130
        $region54: #{tpu_custom_call.1} parent=39 // pred_check_branch
          %264 = sbr.rel (%p262) target = $region56
        $region55: #{tpu_custom_call.1} parent=39 // pred_region
          %265 = dma.done [#allocation10], 512
        $region56: #{tpu_custom_call.1} parent=39 // pred_fallthru
          _
        %p266 = pneg %p41
        %p267 = pneg %p38
        %s268 = sand.u32 %s54, 1
        %s269 = scalar_lea.sflag [#allocation4], %s268
        %s270 = sand.u32 %s54, 1
        %s271 = smul.addr %s270, 96
        %s272 = scalar_lea.vmem [#allocation3], %s271
        %p273 = pneg %p67
        %p274 = pneg %p64
        %p275 = pneg %p88
        %p276 = pneg %p85
        %p277 = pneg %p109
        %p278 = pneg %p106
        %p279 = pneg %p130
        %p280 = pneg %p127
        %p281 = pneg %p156
        %p282 = pneg %p153
        %s283 = sand.u32 %s143, 1
        %s284 = scalar_lea.sflag [#allocation5], %s283
        %s285 = sand.u32 %s143, 1
        %s286 = smul.addr %s285, 32
        %s287 = scalar_lea.vmem [#allocation11], %s286
        %v288 = vld [vmem:[#allocation6] sm:$0xff]
        %v289 = vld [vmem:[#allocation6 + $0x8] sm:$0xff]
        %v290 = vld [vmem:[#allocation6 + $0x10] sm:$0xff]
        %v291 = vld [vmem:[#allocation6 + $0x18] sm:$0xff]
        %v292 = vld [vmem:[#allocation8] sm:$0xff]
        %v293 = vld [vmem:[#allocation8 + $0x8] sm:$0xff]
        %v294 = vld [vmem:[#allocation8 + $0x10] sm:$0xff]
        %v295 = vld [vmem:[#allocation8 + $0x18] sm:$0xff]
        %v296 = vld [vmem:[#allocation8 + $0x20] sm:$0xff]
        %v297 = vld [vmem:[#allocation8 + $0x28] sm:$0xff]
        %v298 = vld [vmem:[#allocation8 + $0x30] sm:$0xff]
        %v299 = vld [vmem:[#allocation8 + $0x38] sm:$0xff]
        %v300 = vld [vmem:[#allocation8 + $0x40] sm:$0xff]
        %v301 = vld [vmem:[#allocation8 + $0x48] sm:$0xff]
        %v302 = vld [vmem:[#allocation8 + $0x50] sm:$0xff]
        %v303 = vld [vmem:[#allocation8 + $0x58] sm:$0xff]
        %v304 = vld [vmem:[#allocation8 + $0x60] sm:$0xff]
        %v305 = vld [vmem:[#allocation8 + $0x68] sm:$0xff]
        %v306 = vld [vmem:[#allocation8 + $0x70] sm:$0xff]
        %v307 = vld [vmem:[#allocation8 + $0x78] sm:$0xff]
        %v308 = vld [vmem:[#allocation9] sm:$0xff]
        %v309 = vld [vmem:[#allocation9 + $0x8] sm:$0xff]
        %v310 = vld [vmem:[#allocation9 + $0x10] sm:$0xff]
        %v311 = vld [vmem:[#allocation9 + $0x18] sm:$0xff]
        %s312 = sld [smem:[#allocation2]]
        %v313 = vld [vmem:[%s249] sm:$0xff]
        %v314 = vld [vmem:[%s249 + $0x8] sm:$0xff]
        %v315 = vld [vmem:[%s249 + $0x10] sm:$0xff]
        %v316 = vld [vmem:[%s249 + $0x18] sm:$0xff]
        %s317 = scalar_lea.vmem %s249, 32 [#allocation3]
        %v318 = vld [vmem:[%s317] sm:$0xff]
        %v319 = vld [vmem:[%s317 + $0x8] sm:$0xff]
        %v320 = vld [vmem:[%s317 + $0x10] sm:$0xff]
        %v321 = vld [vmem:[%s317 + $0x18] sm:$0xff]
        %v322 = vadd.f32 %v313, %v318
        %v323 = vadd.f32 %v314, %v319
        %v324 = vadd.f32 %v315, %v320
        %v325 = vadd.f32 %v316, %v321
        %s326 = scalar_lea.vmem %s249, 64 [#allocation3]
        %v327 = vld [vmem:[%s326] sm:$0xff]
        %v328 = vld [vmem:[%s326 + $0x8] sm:$0xff]
        %v329 = vld [vmem:[%s326 + $0x10] sm:$0xff]
        %v330 = vld [vmem:[%s326 + $0x18] sm:$0xff]
        %v331 = vadd.f32 %v322, %v327
        %v332 = vadd.f32 %v323, %v328
        %v333 = vadd.f32 %v324, %v329
        %v334 = vadd.f32 %v325, %v330
        %vm335 = vcmask 261120
        %v337 = vsel %vm335, %v288, 0
        %v340 = vsel %vm335, %v289, 0
        %v343 = vsel %vm335, %v290, 0
        %v346 = vsel %vm335, %v291, 0
        %348 = vmatprep.subr.mxu0 0.0
        %349 = vmatpush1.msra.mxu0 %v331
        %350 = vmatprep.subr.mxu0 0.0
        %351 = vmatpush1.msra.mxu0 %v332
        %352 = vmatprep.subr.mxu0 0.0
        %353 = vmatpush1.msra.mxu0 %v333
        %354 = vmatprep.subr.mxu0 0.0
        %355 = vmatpush1.msra.mxu0 %v334
        %356 = vmatprep.subr.mxu0 0.0
        %357 = vmatpush1.msra.mxu0 0.0
        %358 = vmatprep.subr.mxu0 0.0
        %359 = vmatpush1.msra.mxu0 0.0
        %360 = vmatprep.subr.mxu0 0.0
        %361 = vmatpush1.msra.mxu0 0.0
        %362 = vmatprep.subr.mxu0 0.0
        %363 = vmatpush1.msra.mxu0 0.0
        %364 = vmatprep.subr.mxu0 0.0
        %365 = vmatpush1.msra.mxu0 0.0
        %366 = vmatprep.subr.mxu0 0.0
        %367 = vmatpush1.msra.mxu0 0.0
        %368 = vmatprep.subr.mxu0 0.0
        %369 = vmatpush1.msra.mxu0 0.0
        %370 = vmatprep.subr.mxu0 0.0
        %371 = vmatpush1.msra.mxu0 0.0
        %372 = vmatprep.subr.mxu0 0.0
        %373 = vmatpush1.msra.mxu0 0.0
        %374 = vmatprep.subr.mxu0 0.0
        %375 = vmatpush1.msra.mxu0 0.0
        %376 = vmatprep.subr.mxu0 0.0
        %377 = vmatpush1.msra.mxu0 0.0
        %378 = vmatprep.subr.mxu0 0.0
        %379 = vmatpush1.msra.mxu0 0.0
        %380 = vmatprep.subr.mxu0 0.0
        %381 = vmatpush1.msra.mxu0 0.0
        %382 = vmatprep.subr.mxu0 0.0
        %383 = vmatpush1.msra.mxu0 0.0
        %384 = vmatprep.subr.mxu0 0.0
        %385 = vmatpush1.msra.mxu0 0.0
        %386 = vmatprep.subr.mxu0 0.0
        %387 = vmatpush1.msra.mxu0 0.0
        %388 = vmatprep.subr.mxu0 0.0
        %389 = vmatpush1.msra.mxu0 0.0
        %390 = vmatprep.subr.mxu0 0.0
        %391 = vmatpush1.msra.mxu0 0.0
        %392 = vmatprep.subr.mxu0 0.0
        %393 = vmatpush1.msra.mxu0 0.0
        %394 = vmatprep.subr.mxu0 0.0
        %395 = vmatpush1.msra.mxu0 0.0
        %396 = vmatprep.subr.mxu0 0.0
        %397 = vmatpush1.msra.mxu0 0.0
        %398 = vmatprep.subr.mxu0 0.0
        %399 = vmatpush1.msra.mxu0 0.0
        %400 = vmatprep.subr.mxu0 0.0
        %401 = vmatpush1.msra.mxu0 0.0
        %402 = vmatprep.subr.mxu0 0.0
        %403 = vmatpush1.msra.mxu0 0.0
        %404 = vmatprep.subr.mxu0 0.0
        %405 = vmatpush1.msra.mxu0 0.0
        %406 = vmatprep.subr.mxu0 0.0
        %407 = vmatpush1.msra.mxu0 0.0
        %408 = vmatprep.subr.mxu0 0.0
        %409 = vmatpush1.msra.mxu0 0.0
        %410 = vmatprep.subr.mxu0 0.0
        %411 = vmatpush1.msra.mxu0 0.0
        %412 = vmatprep.mubr.f32.mxu0 0.0
        %413 = vmatmul.mubr.f32.gmra.mrb[0].mxu0 %v337
        %v414 = vpop.f32.mrb[0].mxu0
        %v415 = vadd.f32 0.0, %v414
        %v416 = vpop.f32.mrb[0].mxu0
        %417 = vmatprep.mubr.f32.mxu0 0.0
        %418 = vmatmul.mubr.f32.gmra.mrb[0].mxu0 %v340
        %v419 = vpop.f32.mrb[0].mxu0
        %v420 = vadd.f32 0.0, %v419
        %v421 = vpop.f32.mrb[0].mxu0
        %422 = vmatprep.mubr.f32.mxu0 0.0
        %423 = vmatmul.mubr.f32.gmra.mrb[0].mxu0 %v343
        %v424 = vpop.f32.mrb[0].mxu0
        %v425 = vadd.f32 0.0, %v424
        %v426 = vpop.f32.mrb[0].mxu0
        %427 = vmatprep.mubr.f32.mxu0 0.0
        %428 = vmatmul.mubr.f32.gmra.mrb[0].mxu0 %v346
        %v429 = vpop.f32.mrb[0].mxu0
        %v430 = vadd.f32 0.0, %v429
        %v431 = vpop.f32.mrb[0].mxu0
        %432 = vdwg.mxu0
        %433 = vmatprep.subr.mxu0 0.0
        %434 = vmatpush1.msra.mxu0 %v292
        %435 = vmatprep.subr.mxu0 0.0
        %436 = vmatpush1.msra.mxu0 %v293
        %437 = vmatprep.subr.mxu0 0.0
        %438 = vmatpush1.msra.mxu0 %v294
        %439 = vmatprep.subr.mxu0 0.0
        %440 = vmatpush1.msra.mxu0 %v295
        %441 = vmatprep.subr.mxu0 0.0
        %442 = vmatpush1.msra.mxu0 %v296
        %443 = vmatprep.subr.mxu0 0.0
        %444 = vmatpush1.msra.mxu0 %v297
        %445 = vmatprep.subr.mxu0 0.0
        %446 = vmatpush1.msra.mxu0 %v298
        %447 = vmatprep.subr.mxu0 0.0
        %448 = vmatpush1.msra.mxu0 %v299
        %449 = vmatprep.subr.mxu0 0.0
        %450 = vmatpush1.msra.mxu0 %v300
        %451 = vmatprep.subr.mxu0 0.0
        %452 = vmatpush1.msra.mxu0 %v301
        %453 = vmatprep.subr.mxu0 0.0
        %454 = vmatpush1.msra.mxu0 %v302
        %455 = vmatprep.subr.mxu0 0.0
        %456 = vmatpush1.msra.mxu0 %v303
        %457 = vmatprep.subr.mxu0 0.0
        %458 = vmatpush1.msra.mxu0 %v304
        %459 = vmatprep.subr.mxu0 0.0
        %460 = vmatpush1.msra.mxu0 %v305
        %461 = vmatprep.subr.mxu0 0.0
        %462 = vmatpush1.msra.mxu0 %v306
        %463 = vmatprep.subr.mxu0 0.0
        %464 = vmatpush1.msra.mxu0 %v307
        %465 = vmatprep.subr.mxu0 0.0
        %466 = vmatpush1.msra.mxu0 0.0
        %467 = vmatprep.subr.mxu0 0.0
        %468 = vmatpush1.msra.mxu0 0.0
        %469 = vmatprep.subr.mxu0 0.0
        %470 = vmatpush1.msra.mxu0 0.0
        %471 = vmatprep.subr.mxu0 0.0
        %472 = vmatpush1.msra.mxu0 0.0
        %473 = vmatprep.subr.mxu0 0.0
        %474 = vmatpush1.msra.mxu0 0.0
        %475 = vmatprep.subr.mxu0 0.0
        %476 = vmatpush1.msra.mxu0 0.0
        %477 = vmatprep.subr.mxu0 0.0
        %478 = vmatpush1.msra.mxu0 0.0
        %479 = vmatprep.subr.mxu0 0.0
        %480 = vmatpush1.msra.mxu0 0.0
        %481 = vmatprep.subr.mxu0 0.0
        %482 = vmatpush1.msra.mxu0 0.0
        %483 = vmatprep.subr.mxu0 0.0
        %484 = vmatpush1.msra.mxu0 0.0
        %485 = vmatprep.subr.mxu0 0.0
        %486 = vmatpush1.msra.mxu0 0.0
        %487 = vmatprep.subr.mxu0 0.0
        %488 = vmatpush1.msra.mxu0 0.0
        %489 = vmatprep.subr.mxu0 0.0
        %490 = vmatpush1.msra.mxu0 0.0
        %491 = vmatprep.subr.mxu0 0.0
        %492 = vmatpush1.msra.mxu0 0.0
        %493 = vmatprep.subr.mxu0 0.0
        %494 = vmatpush1.msra.mxu0 0.0
        %495 = vmatprep.subr.mxu0 0.0
        %496 = vmatpush1.msra.mxu0 0.0
        %497 = vmatprep.mubr.f32.mxu0 0.0
        %498 = vmatmul.mubr.f32.gmra.mrb[0].mxu0 %v415
        %v499 = vpop.f32.mrb[0].mxu0
        %v500 = vadd.f32 0.0, %v499
        %v501 = vpop.f32.mrb[0].mxu0
        %502 = vmatprep.mubr.f32.mxu0 0.0
        %503 = vmatmul.mubr.f32.gmra.mrb[0].mxu0 %v420
        %v504 = vpop.f32.mrb[0].mxu0
        %v505 = vadd.f32 0.0, %v504
        %v506 = vpop.f32.mrb[0].mxu0
        %507 = vmatprep.mubr.f32.mxu0 0.0
        %508 = vmatmul.mubr.f32.gmra.mrb[0].mxu0 %v425
        %v509 = vpop.f32.mrb[0].mxu0
        %v510 = vadd.f32 0.0, %v509
        %v511 = vpop.f32.mrb[0].mxu0
        %512 = vmatprep.mubr.f32.mxu0 0.0
        %513 = vmatmul.mubr.f32.gmra.mrb[0].mxu0 %v430
        %v514 = vpop.f32.mrb[0].mxu0
        %v515 = vadd.f32 0.0, %v514
        %v516 = vpop.f32.mrb[0].mxu0
        %517 = vdwg.mxu0
        %v518 = vstv %s312
        %v519 = vmul.f32 %v518, %v500
        %v520 = vmul.f32 %v518, %v505
        %v521 = vmul.f32 %v518, %v510
        %v522 = vmul.f32 %v518, %v515
        %v523 = vadd.f32 %v519, %v308
        %v524 = vadd.f32 %v520, %v309
        %v525 = vadd.f32 %v521, %v310
        %v526 = vadd.f32 %v522, %v311
        %527 = vst [vmem:[%s287] sm:$0xff] %v523
        %528 = vst [vmem:[%s287 + $0x8] sm:$0xff] %v524
        %529 = vst [vmem:[%s287 + $0x10] sm:$0xff] %v525
        %530 = vst [vmem:[%s287 + $0x18] sm:$0xff] %v526
        %s531 = sand.u32 %s143, 1
        %s532 = scalar_lea.sflag [#allocation5], %s531
        %s533 = sand.u32 %s143, 1
        %s534 = smul.addr %s533, 32
        %s535 = scalar_lea.vmem [#allocation11], %s534
        // Predicated region
        $region57: #{tpu_custom_call.1} parent=39 // pred_check
          %p536 = pneg %p153
        $region58: #{tpu_custom_call.1} parent=39 // pred_check_branch
          %538 = sbr.rel (%p536) target = $region60
        $region59: #{tpu_custom_call.1} parent=39 // pred_region
          %s540 = ssub.s32 512, 512
          %541 = vsyncadd %s532, %s540
          %s542 = smul.addr %s25, 4
          %s543 = smul.addr %s542, 128
          %s544 = scalar_lea.hbm %s5, %s543
          %s545 = sshll.u32 %s535, 4
          %s546 = int_to_ptr.vmem [resolvable:$true] %s545
          %551 = dma.vmem_to_hbm [thread:$0]  %s546, 512, %s544, %s532, 128, 128, 8
        $region60: #{tpu_custom_call.1} parent=39 // pred_fallthru
          _
      $region40: #{tpu_custom_call.1} parent=5 // pred_fallthru
        _
      %p552 = scmp.le.s32.totalorder 2, %s20
      // Predicated region
      $region61: #{tpu_custom_call.1} parent=5 // pred_check
        %p553 = pneg %p552
      $region62: #{tpu_custom_call.1} parent=5 // pred_check_branch
        %555 = sbr.rel (%p553) target = $region64
      $region63: #{tpu_custom_call.1} parent=5 // pred_region
        %s556 = ssub.s32 %s20, 2
        // Predicated region
        $region65: #{tpu_custom_call.1} parent=63 // pred_check
          %p557 = pneg %p159
        $region66: #{tpu_custom_call.1} parent=63 // pred_check_branch
          %559 = sbr.rel (%p557) target = $region68
        $region67: #{tpu_custom_call.1} parent=63 // pred_region
          %s560 = sand.u32 %s144, 1
          %s561 = scalar_lea.sflag [#allocation5], %s560
          %s562 = sand.u32 %s144, 1
          %s563 = smul.addr %s562, 32
          %s564 = scalar_lea.vmem [#allocation11], %s563
          %565 = dma.done %s561, 512
        $region68: #{tpu_custom_call.1} parent=63 // pred_fallthru
          _
      $region64: #{tpu_custom_call.1} parent=5 // pred_fallthru
        _
    $region6: #{tpu_custom_call.1} parent=1 // loop_footer
      %s24 = sadd.s32 1, %s20
    $region7: #{tpu_custom_call.1} parent=1 // loop_footer_branch
      %19 = sbr.rel target = $region3
    $region8: #{tpu_custom_call.1} parent=1 // loop_exit
      _
    %566 = vsyncpa [#allocation4], 1
    %s567 = scalar_lea.sflag [#allocation4], 1
    %568 = vsyncpa %s567, 1
    %569 = vsyncpa [#allocation7], 1
    %570 = vsyncpa [#allocation10], 1
    %571 = vsyncpa [#allocation5], 1
    %s572 = scalar_lea.sflag [#allocation5], 1
    %573 = vsyncpa %s572, 1

</llo_original>
